<compile_context>
chip_gen: v6e
topology: v6e:2x2x1
jax: 0.10.0
libtpu: 0.0.40
codegen_flags: <defaults>
</compile_context>

<pallas_src>
import functools

import jax
import jax.numpy as jnp
from jax.experimental import pallas as pl
from jax.experimental.pallas import tpu as pltpu


def _cdiv(a, b):
    return (a + b - 1) // b


def convmlp_kernel(x_ref, w1_ref, b1_ref, w2_ref, b2_ref, o_ref, *,
                   approx_gelu, elem_dtype):
    # x_ref : (1, C_in, TN)     w1_ref: (C_hid, C_in)   b1_ref: (C_hid, 1)
    # o_ref : (1, C_out, TN)    w2_ref: (C_out, C_hid)  b2_ref: (C_out, 1)
    x = x_ref[0]                                               # (C_in, TN)

    # fc1: (C_hid, C_in) @ (C_in, TN) on the MXU, f32 accumulation.
    h = jnp.dot(w1_ref[...], x, preferred_element_type=jnp.float32)
    # Bias-add on the f32 accumulate, then a single cast into the elementwise
    # compute dtype (f32 normally; packed bf16 when bf16_elementwise is set).
    h = (h + b1_ref[...].astype(jnp.float32)).astype(elem_dtype)

    # norm: Identity (norm_args=None).
    # act:  GELU.  approximate=True -> tanh form: one EUP transcendental plus
    #       a few VALU mul/adds (VALU is the binding slot of this kernel).
    #       approximate=False keeps nn.GELU()'s exact-erf numerics.
    h = jax.nn.gelu(h, approximate=approx_gelu)

    # drop: Dropout(p=0.0) -> identity at inference.
    # fc2: MXU matmul; mixed dtypes promote, so no lossy downcast of h.
    y = jnp.dot(w2_ref[...], h, preferred_element_type=jnp.float32)
    y = y + b2_ref[...].astype(jnp.float32)

    o_ref[0] = y.astype(o_ref.dtype)


@functools.partial(jax.jit,
                   static_argnames=("tile_hw", "approx_gelu", "bf16_elementwise"))
def conv_mlp_forward(x_nchw, w1, b1, w2, b2, *, tile_hw=2048, approx_gelu=True,
                     bf16_elementwise=None):
    """ConvMlp forward.

    x_nchw: (B, C_in, H, W); w1: (C_hid, C_in); b1: (C_hid,);
    w2: (C_out, C_hid); b2: (C_out,).
    """
    B, C_in, H, W = x_nchw.shape
    C_hid = w1.shape[0]
    C_out = w2.shape[0]
    HW = H * W

    # Packed-bf16 elementwise math only when the model itself runs in bf16
    # (v6e/v7x win; keep f32 for f32 models and on v5e).
    if bf16_elementwise is None:
        bf16_elementwise = (x_nchw.dtype == jnp.bfloat16
                            and w2.dtype == jnp.bfloat16)
    elem_dtype = jnp.bfloat16 if bf16_elementwise else jnp.float32

    # NCHW is already channel-major per image -> pure reshape, no transpose.
    x3d = x_nchw.reshape(B, C_in, HW)

    # Spatial tiling: pad only to a 128-lane multiple, then split into evenly
    # sized 128-aligned tiles no larger than tile_hw.  Guarantee >= 2 grid
    # steps along a "parallel" axis so both v7x TensorCores get work.
    n128 = _cdiv(HW, 128)                         # number of 128-lane groups
    max_t128 = max(1, tile_hw // 128)
    num_tiles = _cdiv(n128, max_t128)
    if B * num_tiles < 2 and n128 >= 2:
        num_tiles = 2
    tn = _cdiv(n128, num_tiles) * 128
    HW_pad = tn * num_tiles
    if HW_pad != HW:
        x3d = jnp.pad(x3d, ((0, 0), (0, 0), (0, HW_pad - HW)))

    b1c = b1.reshape(C_hid, 1)
    b2c = b2.reshape(C_out, 1)

    kernel = functools.partial(convmlp_kernel, approx_gelu=approx_gelu,
                               elem_dtype=elem_dtype)

    out3d = pl.pallas_call(
        kernel,
        out_shape=jax.ShapeDtypeStruct((B, C_out, HW_pad), x_nchw.dtype),
        grid_spec=pltpu.PrefetchScalarGridSpec(
            num_scalar_prefetch=0,
            grid=(B, num_tiles),
            in_specs=[
                pl.BlockSpec((1, C_in, tn), lambda b, j: (b, 0, j)),   # x tile
                pl.BlockSpec((C_hid, C_in), lambda b, j: (0, 0)),      # W1 (resident)
                pl.BlockSpec((C_hid, 1), lambda b, j: (0, 0)),         # b1 column
                pl.BlockSpec((C_out, C_hid), lambda b, j: (0, 0)),     # W2 (resident)
                pl.BlockSpec((C_out, 1), lambda b, j: (0, 0)),         # b2 column
            ],
            out_specs=pl.BlockSpec((1, C_out, tn), lambda b, j: (b, 0, j)),
        ),
        compiler_params=pltpu.CompilerParams(
            dimension_semantics=("parallel", "parallel")),
    )(x3d, w1, b1c, w2, b2c)

    # Drop spatial padding, restore NCHW (reshape only, no transpose).
    return out3d[:, :, :HW].reshape(B, C_out, H, W)


def _reference(x_nchw, w1, b1, w2, b2, *, approximate):
    """Pure-JAX reference of the PyTorch ConvMlp forward."""
    h = jnp.einsum("oc,bchw->bohw", w1, x_nchw) + b1[None, :, None, None]
    h = jax.nn.gelu(h, approximate=approximate)
    y = jnp.einsum("oc,bchw->bohw", w2, h) + b2[None, :, None, None]
    return y


if __name__ == "__main__":
    key = jax.random.PRNGKey(0)
    kx, k1, k2, k3, k4 = jax.random.split(key, 5)

    # Shapes implied by the module: in_features=4, hidden_features=32, out_features=4
    B, C_in, H, W = 2, 4, 16, 16
    C_hid, C_out = 32, 4

    x = jax.random.normal(kx, (B, C_in, H, W), dtype=jnp.float32)
    # Conv2d weight shape (out, in, 1, 1) squeezed to (out, in).
    w1 = jax.random.normal(k1, (C_hid, C_in), dtype=jnp.float32) * (1.0 / jnp.sqrt(C_in))
    b1 = jax.random.normal(k2, (C_hid,), dtype=jnp.float32) * 0.01
    w2 = jax.random.normal(k3, (C_out, C_hid), dtype=jnp.float32) * (1.0 / jnp.sqrt(C_hid))
    b2 = jax.random.normal(k4, (C_out,), dtype=jnp.float32) * 0.01

    # Default (perf) path: tanh-GELU on the EUP.
    out = jax.block_until_ready(conv_mlp_forward(x, w1, b1, w2, b2))
    assert out.shape == (B, C_out, H, W), out.shape

    ref_tanh = _reference(x, w1, b1, w2, b2, approximate=True)
    ref_erf = _reference(x, w1, b1, w2, b2, approximate=False)
    # Tight check against the same-GELU reference.
    assert jnp.allclose(out, ref_tanh, atol=1e-4, rtol=1e-4), \
        float(jnp.max(jnp.abs(out - ref_tanh)))
    # Tolerance sign-off of the tanh-GELU drift vs nn.GELU()'s exact erf.
    assert jnp.allclose(out, ref_erf, atol=5e-3, rtol=0.0), \
        float(jnp.max(jnp.abs(out - ref_erf)))

    # Strict-parity path: exact-erf GELU matches the PyTorch module tightly.
    out_exact = jax.block_until_ready(
        conv_mlp_forward(x, w1, b1, w2, b2, approx_gelu=False))
    assert jnp.allclose(out_exact, ref_erf, atol=1e-4, rtol=1e-4), \
        float(jnp.max(jnp.abs(out_exact - ref_erf)))

    # Odd spatial size + B=1: exercises 128-granular padding and the forced
    # >=2-tile spatial split (keeps both v7x TensorCores busy).
    x1 = jax.random.normal(kx, (1, C_in, 12, 11), dtype=jnp.float32)
    out1 = jax.block_until_ready(conv_mlp_forward(x1, w1, b1, w2, b2))
    ref1 = _reference(x1, w1, b1, w2, b2, approximate=True)
    assert out1.shape == (1, C_out, 12, 11), out1.shape
    assert jnp.allclose(out1, ref1, atol=1e-4, rtol=1e-4), \
        float(jnp.max(jnp.abs(out1 - ref1)))

    print("KERNEL_OK")
</pallas_src>

<mosaic_0001>
module attributes {stable_mosaic.version = 11 : i64} {
  func.func @convmlp_kernel(%arg0: i32, %arg1: i32, %arg2: memref<1x4x256xf32, #tpu.memory_space<vmem>>, %arg3: memref<32x4xf32, #tpu.memory_space<vmem>>, %arg4: memref<32x1xf32, #tpu.memory_space<vmem>>, %arg5: memref<4x32xf32, #tpu.memory_space<vmem>>, %arg6: memref<4x1xf32, #tpu.memory_space<vmem>>, %arg7: memref<1x4x256xf32, #tpu.memory_space<vmem>>) attributes {dimension_semantics = [#tpu.dimension_semantics<parallel>, #tpu.dimension_semantics<parallel>], iteration_bounds = array<i64: 2, 1>, scalar_prefetch = 0 : i64, scratch_operands = 0 : i64, tpu.core_type = #tpu.core_type<tc>, window_params = [{transform_indices = @transform_0, window_bounds = array<i64: 1, 4, 256>}, {pipeline_mode = #tpu.pipeline_mode<synchronous>, transform_indices = @transform_1, window_bounds = array<i64: 32, 4>}, {pipeline_mode = #tpu.pipeline_mode<synchronous>, transform_indices = @transform_2, window_bounds = array<i64: 32, 1>}, {pipeline_mode = #tpu.pipeline_mode<synchronous>, transform_indices = @transform_3, window_bounds = array<i64: 4, 32>}, {pipeline_mode = #tpu.pipeline_mode<synchronous>, transform_indices = @transform_4, window_bounds = array<i64: 4, 1>}, {transform_indices = @transform_5, window_bounds = array<i64: 1, 4, 256>}]} {
    %c0 = arith.constant 0 : index
    %c0_0 = arith.constant 0 : index
    %c0_1 = arith.constant 0 : index
    %0 = vector.load %arg2[%c0, %c0_0, %c0_1] : memref<1x4x256xf32, #tpu.memory_space<vmem>>, vector<1x4x256xf32>
    %1 = vector.shape_cast %0 : vector<1x4x256xf32> to vector<4x256xf32>
    %c0_2 = arith.constant 0 : index
    %c0_3 = arith.constant 0 : index
    %2 = vector.load %arg3[%c0_2, %c0_3] : memref<32x4xf32, #tpu.memory_space<vmem>>, vector<32x4xf32>
    %cst = arith.constant dense<0.000000e+00> : vector<32x256xf32>
    %3 = tpu.matmul %2, %1, %cst {dimension_numbers = #tpu.dot_dimension_numbers<[1], [0], [0], [1], [0, 0, 1, 1], [], []>} : vector<32x4xf32>, vector<4x256xf32>, vector<32x256xf32> -> vector<32x256xf32>
    %c0_4 = arith.constant 0 : index
    %c0_5 = arith.constant 0 : index
    %4 = vector.load %arg4[%c0_4, %c0_5] : memref<32x1xf32, #tpu.memory_space<vmem>>, vector<32x1xf32>
    %5 = vector.broadcast %4 : vector<32x1xf32> to vector<32x256xf32>
    %6 = arith.addf %3, %5 : vector<32x256xf32>
    %7 = arith.mulf %6, %6 : vector<32x256xf32>
    %8 = arith.mulf %6, %7 : vector<32x256xf32>
    %cst_6 = arith.constant 4.471500e-02 : f32
    %9 = vector.broadcast %cst_6 : f32 to vector<32x256xf32>
    %10 = arith.mulf %9, %8 : vector<32x256xf32>
    %11 = arith.addf %6, %10 : vector<32x256xf32>
    %cst_7 = arith.constant 0.797884583 : f32
    %12 = vector.broadcast %cst_7 : f32 to vector<32x256xf32>
    %13 = arith.mulf %12, %11 : vector<32x256xf32>
    %14 = math.tanh %13 : vector<32x256xf32>
    %cst_8 = arith.constant 1.000000e+00 : f32
    %15 = vector.broadcast %cst_8 : f32 to vector<32x256xf32>
    %16 = arith.addf %15, %14 : vector<32x256xf32>
    %cst_9 = arith.constant 5.000000e-01 : f32
    %17 = vector.broadcast %cst_9 : f32 to vector<32x256xf32>
    %18 = arith.mulf %17, %16 : vector<32x256xf32>
    %19 = arith.mulf %6, %18 : vector<32x256xf32>
    %c0_10 = arith.constant 0 : index
    %c0_11 = arith.constant 0 : index
    %20 = vector.load %arg5[%c0_10, %c0_11] : memref<4x32xf32, #tpu.memory_space<vmem>>, vector<4x32xf32>
    %cst_12 = arith.constant dense<0.000000e+00> : vector<4x256xf32>
    %21 = tpu.matmul %20, %19, %cst_12 {dimension_numbers = #tpu.dot_dimension_numbers<[1], [0], [0], [1], [0, 0, 1, 1], [], []>} : vector<4x32xf32>, vector<32x256xf32>, vector<4x256xf32> -> vector<4x256xf32>
    %c0_13 = arith.constant 0 : index
    %c0_14 = arith.constant 0 : index
    %22 = vector.load %arg6[%c0_13, %c0_14] : memref<4x1xf32, #tpu.memory_space<vmem>>, vector<4x1xf32>
    %23 = vector.broadcast %22 : vector<4x1xf32> to vector<4x256xf32>
    %24 = arith.addf %21, %23 : vector<4x256xf32>
    %c0_15 = arith.constant 0 : index
    %c0_16 = arith.constant 0 : index
    %c0_17 = arith.constant 0 : index
    %25 = vector.load %arg7[%c0_15, %c0_16, %c0_17] : memref<1x4x256xf32, #tpu.memory_space<vmem>>, vector<1x4x256xf32>
    %26 = vector.shape_cast %25 : vector<1x4x256xf32> to vector<4x256xf32>
    %27 = vector.shape_cast %24 : vector<4x256xf32> to vector<1x4x256xf32>
    tpu.vector_store %arg7[%c0_15, %c0_16, %c0_17], %27 {strides = array<i32>} : memref<1x4x256xf32, #tpu.memory_space<vmem>>, vector<1x4x256xf32>,
    return
  }
  func.func @transform_0(%arg0: i32, %arg1: i32) -> (i32, i32, i32) {
    %c0_i32 = arith.constant 0 : i32
    %c0_i32_0 = arith.constant 0 : i32
    return %arg0, %c0_i32, %arg1 : i32, i32, i32
  }
  func.func @transform_1(%arg0: i32, %arg1: i32) -> (i32, i32) {
    %c0_i32 = arith.constant 0 : i32
    %c0_i32_0 = arith.constant 0 : i32
    %c0_i32_1 = arith.constant 0 : i32
    return %c0_i32, %c0_i32_0 : i32, i32
  }
  func.func @transform_2(%arg0: i32, %arg1: i32) -> (i32, i32) {
    %c0_i32 = arith.constant 0 : i32
    %c0_i32_0 = arith.constant 0 : i32
    %c0_i32_1 = arith.constant 0 : i32
    return %c0_i32, %c0_i32_0 : i32, i32
  }
  func.func @transform_3(%arg0: i32, %arg1: i32) -> (i32, i32) {
    %c0_i32 = arith.constant 0 : i32
    %c0_i32_0 = arith.constant 0 : i32
    %c0_i32_1 = arith.constant 0 : i32
    return %c0_i32, %c0_i32_0 : i32, i32
  }
  func.func @transform_4(%arg0: i32, %arg1: i32) -> (i32, i32) {
    %c0_i32 = arith.constant 0 : i32
    %c0_i32_0 = arith.constant 0 : i32
    %c0_i32_1 = arith.constant 0 : i32
    return %c0_i32, %c0_i32_0 : i32, i32
  }
  func.func @transform_5(%arg0: i32, %arg1: i32) -> (i32, i32, i32) {
    %c0_i32 = arith.constant 0 : i32
    %c0_i32_0 = arith.constant 0 : i32
    return %arg0, %c0_i32, %arg1 : i32, i32, i32
  }
}

</mosaic_0001>

<llo_original>
// kernel: conv_mlp_forward.1
$region0: #{conv_mlp_forward.1}
  #allocation0 [shape = 'u32[]', space=smem, size = 0x4, offset = 0x4, fixed_abs, tag = 'smem constant byte address 0x4 - core index']
  #allocation1 [shape = 'u32[144,128]{1,0:T(1,128)}', space=vmem, size = 0x12000, scoped, tag = 'internal scratch']
  %s0 = inlined_call_operand.vmem [shape: f32[2,4,256], index: 0, kind: input, shape index: {}]
  %s1 = inlined_call_operand.vmem [shape: f32[32,4], index: 1, kind: input, shape index: {}]
  %s2 = inlined_call_operand.vmem [shape: f32[32,1], index: 2, kind: input, shape index: {}]
  %s3 = inlined_call_operand.vmem [shape: f32[4,32], index: 3, kind: input, shape index: {}]
  %s4 = inlined_call_operand.vmem [shape: f32[4,1], index: 4, kind: input, shape index: {}]
  %s5 = inlined_call_operand.vmem [shape: f32[2,4,256], index: 5, kind: output, shape index: {}]
  %s6 = sld [smem:[#allocation0]]
  $region53: #{conv_mlp_forward.1} parent=0
    _
  %s8 = ssub.s32 1, %s6
  %s9 = scalar_select 0, %s8, %s6
  loop: start=0, step=1, limit=4
  $region2: #{conv_mlp_forward.1} parent=0 // loop_pre_header
    _
  $region3: #{conv_mlp_forward.1} parent=0 // loop_header
    %s11 = sphi 0, %s15
    %p12 = scmp.ge.s32.totalorder %s11, 4
    %s18 = sphi 0, %s30
    %s19 = sphi 0, %s26
    %s20 = sphi 0, %s18
    %s21 = sphi 0, %s19
    %s22 = sphi 0, %s20
    %s23 = sphi 0, %s21
    %s35 = sphi 0, %s37
    %s38 = sphi 0, %s35
    %s39 = sphi 0, %s38
    %s55 = sphi 0, %s39
    %s59 = sphi 0, %s59
    %s61 = sphi 0, %s59
    %s62 = sphi 0, %s61
    %s76 = sphi 0, %s62
    %s80 = sphi 0, %s80
    %s82 = sphi 0, %s80
    %s83 = sphi 0, %s82
    %s97 = sphi 0, %s83
    %s101 = sphi 0, %s101
    %s103 = sphi 0, %s101
    %s104 = sphi 0, %s103
    %s118 = sphi 0, %s104
    %s122 = sphi 0, %s122
    %s124 = sphi 0, %s122
    %s125 = sphi 0, %s124
    %s139 = sphi 0, %s125
    %s147 = sphi 0, %s149
    %s150 = sphi 0, %s147
    %s151 = sphi 0, %s150
    %s167 = sphi 0, %s151
  $region4: #{conv_mlp_forward.1} parent=0 // loop_header_branch
    %14 = sbr.rel (%p12) target = $region8
  $region5: #{conv_mlp_forward.1} parent=0 // loop_body
    %s16 = ssub.s32 %s11, 1
    %s17 = ssub.s32 %s11, 2
    %s24 = sadd.s32 1, %s19
    %p25 = scmp.ge.s32.totalorder %s24, 1
    %s26 = scalar_select %p25, 0, %s24
    %s27 = sadd.s32 1, %s18
    %s28 = scalar_select %p25, %s27, %s18
    %p29 = scmp.ge.s32.totalorder %s28, 2
    %s30 = scalar_select %p29, 0, %s28
    %s31 = ssub.s32 %s18, %s30
    %s32 = ssub.s32 %s19, %s26
    %s33 = sor.u32 %s31, %s32
    %p34 = scmp.eq.s32.totalorder %s33, 0
    %s36 = sadd.s32 %s35, 1
    %s37 = scalar_select %p34, %s35, %s36
    %p40 = pneg %p34
    %p41 = scmp.eq.s32.totalorder %s11, 1
    %p42 = por %p40, %p41
    %p43 = scmp.ne.s32.totalorder %s35, %s38
    %p44 = scmp.eq.s32.totalorder %s11, 0
    %p45 = por %p43, %p44
    %p46 = scmp.ne.s32.totalorder %s35, %s38
    %p47 = scmp.eq.s32.totalorder %s16, 1
    %p48 = por %p46, %p47
    %p49 = scmp.ne.s32.totalorder %s38, %s39
    %p50 = scmp.eq.s32.totalorder %s16, 0
    %p51 = por %p49, %p50
    %p52 = scmp.ne.s32.totalorder %s38, %s39
    %p53 = scmp.eq.s32.totalorder %s17, 1
    %p54 = por %p52, %p53
    %p56 = scmp.ne.s32.totalorder %s39, %s55
    %p57 = scmp.eq.s32.totalorder %s17, 0
    %p58 = por %p56, %p57
    %s60 = sadd.s32 %s59, 1
    %p63 = scmp.eq.s32.totalorder %s11, 1
    %p64 = scmp.ne.s32.totalorder %s59, %s61
    %p65 = scmp.eq.s32.totalorder %s11, 0
    %p66 = por %p64, %p65
    %p67 = scmp.ne.s32.totalorder %s59, %s61
    %p68 = scmp.eq.s32.totalorder %s16, 1
    %p69 = por %p67, %p68
    %p70 = scmp.ne.s32.totalorder %s61, %s62
    %p71 = scmp.eq.s32.totalorder %s16, 0
    %p72 = por %p70, %p71
    %p73 = scmp.ne.s32.totalorder %s61, %s62
    %p74 = scmp.eq.s32.totalorder %s17, 1
    %p75 = por %p73, %p74
    %p77 = scmp.ne.s32.totalorder %s62, %s76
    %p78 = scmp.eq.s32.totalorder %s17, 0
    %p79 = por %p77, %p78
    %s81 = sadd.s32 %s80, 1
    %p84 = scmp.eq.s32.totalorder %s11, 1
    %p85 = scmp.ne.s32.totalorder %s80, %s82
    %p86 = scmp.eq.s32.totalorder %s11, 0
    %p87 = por %p85, %p86
    %p88 = scmp.ne.s32.totalorder %s80, %s82
    %p89 = scmp.eq.s32.totalorder %s16, 1
    %p90 = por %p88, %p89
    %p91 = scmp.ne.s32.totalorder %s82, %s83
    %p92 = scmp.eq.s32.totalorder %s16, 0
    %p93 = por %p91, %p92
    %p94 = scmp.ne.s32.totalorder %s82, %s83
    %p95 = scmp.eq.s32.totalorder %s17, 1
    %p96 = por %p94, %p95
    %p98 = scmp.ne.s32.totalorder %s83, %s97
    %p99 = scmp.eq.s32.totalorder %s17, 0
    %p100 = por %p98, %p99
    %s102 = sadd.s32 %s101, 1
    %p105 = scmp.eq.s32.totalorder %s11, 1
    %p106 = scmp.ne.s32.totalorder %s101, %s103
    %p107 = scmp.eq.s32.totalorder %s11, 0
    %p108 = por %p106, %p107
    %p109 = scmp.ne.s32.totalorder %s101, %s103
    %p110 = scmp.eq.s32.totalorder %s16, 1
    %p111 = por %p109, %p110
    %p112 = scmp.ne.s32.totalorder %s103, %s104
    %p113 = scmp.eq.s32.totalorder %s16, 0
    %p114 = por %p112, %p113
    %p115 = scmp.ne.s32.totalorder %s103, %s104
    %p116 = scmp.eq.s32.totalorder %s17, 1
    %p117 = por %p115, %p116
    %p119 = scmp.ne.s32.totalorder %s104, %s118
    %p120 = scmp.eq.s32.totalorder %s17, 0
    %p121 = por %p119, %p120
    %s123 = sadd.s32 %s122, 1
    %p126 = scmp.eq.s32.totalorder %s11, 1
    %p127 = scmp.ne.s32.totalorder %s122, %s124
    %p128 = scmp.eq.s32.totalorder %s11, 0
    %p129 = por %p127, %p128
    %p130 = scmp.ne.s32.totalorder %s122, %s124
    %p131 = scmp.eq.s32.totalorder %s16, 1
    %p132 = por %p130, %p131
    %p133 = scmp.ne.s32.totalorder %s124, %s125
    %p134 = scmp.eq.s32.totalorder %s16, 0
    %p135 = por %p133, %p134
    %p136 = scmp.ne.s32.totalorder %s124, %s125
    %p137 = scmp.eq.s32.totalorder %s17, 1
    %p138 = por %p136, %p137
    %p140 = scmp.ne.s32.totalorder %s125, %s139
    %p141 = scmp.eq.s32.totalorder %s17, 0
    %p142 = por %p140, %p141
    %s143 = ssub.s32 %s18, %s30
    %s144 = ssub.s32 %s19, %s26
    %s145 = sor.u32 %s143, %s144
    %p146 = scmp.eq.s32.totalorder %s145, 0
    %s148 = sadd.s32 %s147, 1
    %s149 = scalar_select %p146, %s147, %s148
    %p152 = pneg %p146
    %p153 = scmp.eq.s32.totalorder %s11, 1
    %p154 = por %p152, %p153
    %p155 = scmp.ne.s32.totalorder %s147, %s150
    %p156 = scmp.eq.s32.totalorder %s11, 0
    %p157 = por %p155, %p156
    %p158 = scmp.ne.s32.totalorder %s147, %s150
    %p159 = scmp.eq.s32.totalorder %s16, 1
    %p160 = por %p158, %p159
    %p161 = scmp.ne.s32.totalorder %s150, %s151
    %p162 = scmp.eq.s32.totalorder %s16, 0
    %p163 = por %p161, %p162
    %p164 = scmp.ne.s32.totalorder %s150, %s151
    %p165 = scmp.eq.s32.totalorder %s17, 1
    %p166 = por %p164, %p165
    %p168 = scmp.ne.s32.totalorder %s151, %s167
    %p169 = scmp.eq.s32.totalorder %s17, 0
    %p170 = por %p168, %p169
    %p171 = scmp.le.s32.totalorder 1, %s11
    %p172 = scmp.lt.s32.totalorder %s11, 3
    %p173 = pnand %p171, %p172
    %p174 = pneg %p173
    // Predicated region
    $region9: #{conv_mlp_forward.1} parent=5 // pred_check
      _
    $region10: #{conv_mlp_forward.1} parent=5 // pred_check_branch
      %176 = sbr.rel (%p173) target = $region12
    $region11: #{conv_mlp_forward.1} parent=5 // pred_region
      %s177 = ssub.s32 %s11, 1
      // Predicated region
      $region13: #{conv_mlp_forward.1} parent=11 // pred_check
        %p178 = pneg %p72
      $region14: #{conv_mlp_forward.1} parent=11 // pred_check_branch
        %180 = sbr.rel (%p178) target = $region16
      $region15: #{conv_mlp_forward.1} parent=11 // pred_region
        _
      $region16: #{conv_mlp_forward.1} parent=11 // pred_fallthru
        _
      // Predicated region
      $region17: #{conv_mlp_forward.1} parent=11 // pred_check
        %p181 = pneg %p93
      $region18: #{conv_mlp_forward.1} parent=11 // pred_check_branch
        %183 = sbr.rel (%p181) target = $region20
      $region19: #{conv_mlp_forward.1} parent=11 // pred_region
        _
      $region20: #{conv_mlp_forward.1} parent=11 // pred_fallthru
        _
      // Predicated region
      $region21: #{conv_mlp_forward.1} parent=11 // pred_check
        %p184 = pneg %p114
      $region22: #{conv_mlp_forward.1} parent=11 // pred_check_branch
        %186 = sbr.rel (%p184) target = $region24
      $region23: #{conv_mlp_forward.1} parent=11 // pred_region
        _
      $region24: #{conv_mlp_forward.1} parent=11 // pred_fallthru
        _
      // Predicated region
      $region25: #{conv_mlp_forward.1} parent=11 // pred_check
        %p187 = pneg %p135
      $region26: #{conv_mlp_forward.1} parent=11 // pred_check_branch
        %189 = sbr.rel (%p187) target = $region28
      $region27: #{conv_mlp_forward.1} parent=11 // pred_region
        _
      $region28: #{conv_mlp_forward.1} parent=11 // pred_fallthru
        _
    $region12: #{conv_mlp_forward.1} parent=5 // pred_fallthru
      _
    %p190 = scmp.lt.s32.totalorder %s11, 2
    // Predicated region
    $region29: #{conv_mlp_forward.1} parent=5 // pred_check
      %p191 = pneg %p190
    $region30: #{conv_mlp_forward.1} parent=5 // pred_check_branch
      %193 = sbr.rel (%p191) target = $region32
    $region31: #{conv_mlp_forward.1} parent=5 // pred_region
      // Predicated region
      $region33: #{conv_mlp_forward.1} parent=31 // pred_check
        %p194 = pneg %p45
      $region34: #{conv_mlp_forward.1} parent=31 // pred_check_branch
        %196 = sbr.rel (%p194) target = $region36
      $region35: #{conv_mlp_forward.1} parent=31 // pred_region
        %s197 = smul.u32 2, %s19
        %p198 = scmp.lt.s32.totalorder %s18, 1
        %s199 = scalar_select %p198, %s18, 1
        %p200 = scmp.lt.s32.totalorder %s197, 1
        %s201 = scalar_select %p200, %s197, 1
        %s202 = smul.addr %s199, 2
        %s203 = sadd.s32 %s201, %s202
        %s204 = smul.addr %s203, 4
        %s205 = scalar_lea.vmem %s0, %s204
        %s206 = smul.u32 2, %s19
      $region36: #{conv_mlp_forward.1} parent=31 // pred_fallthru
        _
    $region32: #{conv_mlp_forward.1} parent=5 // pred_fallthru
      _
    %p207 = scmp.le.s32.totalorder 1, %s11
    %p208 = scmp.lt.s32.totalorder %s11, 3
    %p209 = pnand %p207, %p208
    %p210 = pneg %p209
    // Predicated region
    $region37: #{conv_mlp_forward.1} parent=5 // pred_check
      _
    $region38: #{conv_mlp_forward.1} parent=5 // pred_check_branch
      %212 = sbr.rel (%p209) target = $region40
    $region39: #{conv_mlp_forward.1} parent=5 // pred_region
      %s213 = ssub.s32 %s11, 1
      %s214 = smul.u32 2, %s21
      %p215 = scmp.lt.s32.totalorder %s20, 1
      %s216 = scalar_select %p215, %s20, 1
      %p217 = scmp.lt.s32.totalorder %s214, 1
      %s218 = scalar_select %p217, %s214, 1
      %s219 = smul.addr %s216, 2
      %s220 = sadd.s32 %s218, %s219
      %s221 = smul.addr %s220, 4
      %s222 = scalar_lea.vmem %s0, %s221
      %p223 = pneg %p51
      %p224 = pneg %p48
      %p225 = pneg %p72
      %p226 = pneg %p69
      %p227 = pneg %p93
      %p228 = pneg %p90
      %p229 = pneg %p114
      %p230 = pneg %p111
      %p231 = pneg %p135
      %p232 = pneg %p132
      %p233 = pneg %p163
      %p234 = pneg %p160
      %s235 = smul.u32 2, %s21
      %p236 = scmp.lt.s32.totalorder %s20, 1
      %s237 = scalar_select %p236, %s20, 1
      %p238 = scmp.lt.s32.totalorder %s235, 1
      %s239 = scalar_select %p238, %s235, 1
      %s240 = smul.addr %s237, 2
      %s241 = sadd.s32 %s239, %s240
      %s242 = smul.addr %s241, 4
      %s243 = scalar_lea.vmem %s5, %s242
      %s244 = smul.u32 2, %s21
      %p245 = scmp.lt.s32.totalorder %s20, 1
      %s246 = scalar_select %p245, %s20, 1
      %p247 = scmp.lt.s32.totalorder %s244, 1
      %s248 = scalar_select %p247, %s244, 1
      %s249 = smul.addr %s246, 2
      %s250 = sadd.s32 %s248, %s249
      %s251 = smul.addr %s250, 4
      %s252 = scalar_lea.vmem %s0, %s251
      %s253 = smul.u32 2, %s21
      %s254 = smul.u32 2, %s21
      %p255 = scmp.lt.s32.totalorder %s20, 1
      %s256 = scalar_select %p255, %s20, 1
      %p257 = scmp.lt.s32.totalorder %s254, 1
      %s258 = scalar_select %p257, %s254, 1
      %s259 = smul.addr %s256, 2
      %s260 = sadd.s32 %s258, %s259
      %s261 = smul.addr %s260, 4
      %s262 = scalar_lea.vmem %s5, %s261
      %s263 = smul.u32 2, %s21
      %v264 = vld [vmem:[%s252] sm:$0xff]
      %v265 = vld [vmem:[%s1] sm:$0xff]
      %v266 = vld [vmem:[%s1 + $0x8] sm:$0xff]
      %v267 = vld [vmem:[%s1 + $0x10] sm:$0xff]
      %v268 = vld [vmem:[%s1 + $0x18] sm:$0xff]
      %v269 = vld [vmem:[%s2] sm:$0xff]
      %v270 = vld [vmem:[%s2 + $0x8] sm:$0xff]
      %v271 = vld [vmem:[%s2 + $0x10] sm:$0xff]
      %v272 = vld [vmem:[%s2 + $0x18] sm:$0xff]
      %274 = vset.pattern.permute.xlu0 0
      %275 = vperm.xlu0 %274, %v269
      %v276 = vpop.permute.xlu0 %275
      %279 = vset.pattern.permute.xlu0 0
      %280 = vperm.xlu0 %279, %v270
      %v281 = vpop.permute.xlu0 %280
      %284 = vset.pattern.permute.xlu0 0
      %285 = vperm.xlu0 %284, %v271
      %v286 = vpop.permute.xlu0 %285
      %289 = vset.pattern.permute.xlu0 0
      %290 = vperm.xlu0 %289, %v272
      %v291 = vpop.permute.xlu0 %290
      %v294 = vcombine.high %v264, %v264
      %vm295 = vcmask 31744
      %v297 = vsel %vm295, %v265, 0
      %v300 = vsel %vm295, %v266, 0
      %v303 = vsel %vm295, %v267, 0
      %v306 = vsel %vm295, %v268, 0
      %vm308 = vcmask 1043456
      %v309 = vsel %vm308, %v264, 0
      %v311 = vsel %vm308, %v294, 0
      %313 = vmatprep.subr.mxu0 0.0
      %314 = vmatpush1.msra.mxu0 0.0
      %315 = vmatprep.subr.mxu0 0.0
      %316 = vmatpush1.msra.mxu0 0.0
      %317 = vmatprep.subr.mxu0 0.0
      %318 = vmatpush1.msra.mxu0 0.0
      %319 = vmatprep.subr.mxu0 0.0
      %320 = vmatpush1.msra.mxu0 0.0
      %321 = vmatprep.subr.mxu0 0.0
      %322 = vmatpush1.msra.mxu0 0.0
      %323 = vmatprep.subr.mxu0 0.0
      %324 = vmatpush1.msra.mxu0 0.0
      %325 = vmatprep.subr.mxu0 0.0
      %326 = vmatpush1.msra.mxu0 0.0
      %327 = vmatprep.subr.mxu0 0.0
      %328 = vmatpush1.msra.mxu0 0.0
      %329 = vmatprep.subr.mxu0 0.0
      %330 = vmatpush1.msra.mxu0 0.0
      %331 = vmatprep.subr.mxu0 0.0
      %332 = vmatpush1.msra.mxu0 0.0
      %333 = vmatprep.subr.mxu0 0.0
      %334 = vmatpush1.msra.mxu0 0.0
      %335 = vmatprep.subr.mxu0 0.0
      %336 = vmatpush1.msra.mxu0 0.0
      %337 = vmatprep.subr.mxu0 0.0
      %338 = vmatpush1.msra.mxu0 0.0
      %339 = vmatprep.subr.mxu0 0.0
      %340 = vmatpush1.msra.mxu0 0.0
      %341 = vmatprep.subr.mxu0 0.0
      %342 = vmatpush1.msra.mxu0 0.0
      %343 = vmatprep.subr.mxu0 %v311
      %344 = vmatpush1.msra.mxu0 %v309
      %345 = vmatprep.subr.mxu0 0.0
      %346 = vmatpush2.msra.mxu0 0.0
      %347 = vmatprep.subr.mxu0 0.0
      %348 = vmatpush2.msra.mxu0 0.0
      %349 = vmatprep.subr.mxu0 0.0
      %350 = vmatpush2.msra.mxu0 0.0
      %351 = vmatprep.subr.mxu0 0.0
      %352 = vmatpush2.msra.mxu0 0.0
      %353 = vmatprep.subr.mxu0 0.0
      %354 = vmatpush2.msra.mxu0 0.0
      %355 = vmatprep.subr.mxu0 0.0
      %356 = vmatpush2.msra.mxu0 0.0
      %357 = vmatprep.subr.mxu0 0.0
      %358 = vmatpush2.msra.mxu0 0.0
      %359 = vmatprep.subr.mxu0 0.0
      %360 = vmatpush2.msra.mxu0 0.0
      %361 = vmatprep.subr.mxu0 0.0
      %362 = vmatpush2.msra.mxu0 0.0
      %363 = vmatprep.subr.mxu0 0.0
      %364 = vmatpush2.msra.mxu0 0.0
      %365 = vmatprep.subr.mxu0 0.0
      %366 = vmatpush2.msra.mxu0 0.0
      %367 = vmatprep.subr.mxu0 0.0
      %368 = vmatpush2.msra.mxu0 0.0
      %369 = vmatprep.subr.mxu0 0.0
      %370 = vmatpush2.msra.mxu0 0.0
      %371 = vmatprep.subr.mxu0 0.0
      %372 = vmatpush2.msra.mxu0 0.0
      %373 = vmatprep.subr.mxu0 0.0
      %374 = vmatpush2.msra.mxu0 0.0
      %375 = vmatprep.subr.mxu0 0.0
      %376 = vmatpush2.msra.mxu0 0.0
      %377 = vmatprep.mubr.f32.mxu0 0.0
      %378 = vmatmul.mubr.f32.gmra.mxu0 %v297
      %v379 = vpop.f32.mrf.mxu0
      %v380 = vadd.f32 %v276, %v379
      %v381 = vpop.f32.mrf.mxu0
      %v382 = vadd.f32 %v276, %v381
      %383 = vmatprep.mubr.f32.mxu0 0.0
      %384 = vmatmul.mubr.f32.gmra.mxu0 %v300
      %v385 = vpop.f32.mrf.mxu0
      %v386 = vadd.f32 %v281, %v385
      %v387 = vpop.f32.mrf.mxu0
      %v388 = vadd.f32 %v281, %v387
      %389 = vmatprep.mubr.f32.mxu0 0.0
      %390 = vmatmul.mubr.f32.gmra.mxu0 %v303
      %v391 = vpop.f32.mrf.mxu0
      %v392 = vadd.f32 %v286, %v391
      %v393 = vpop.f32.mrf.mxu0
      %v394 = vadd.f32 %v286, %v393
      %395 = vmatprep.mubr.f32.mxu0 0.0
      %396 = vmatmul.mubr.f32.gmra.mxu0 %v306
      %v397 = vpop.f32.mrf.mxu0
      %v398 = vadd.f32 %v291, %v397
      %v399 = vpop.f32.mrf.mxu0
      %v400 = vadd.f32 %v291, %v399
      %401 = vdwg.mxu0
      %v402 = vmul.f32 %v380, %v380
      %v403 = vmul.f32 %v382, %v382
      %v404 = vmul.f32 %v386, %v386
      %v405 = vmul.f32 %v388, %v388
      %v406 = vmul.f32 %v392, %v392
      %v407 = vmul.f32 %v394, %v394
      %v408 = vmul.f32 %v398, %v398
      %v409 = vmul.f32 %v400, %v400
      %v410 = vmul.f32 %v380, %v402
      %v411 = vmul.f32 %v382, %v403
      %v412 = vmul.f32 %v386, %v404
      %v413 = vmul.f32 %v388, %v405
      %v414 = vmul.f32 %v392, %v406
      %v415 = vmul.f32 %v394, %v407
      %v416 = vmul.f32 %v398, %v408
      %v417 = vmul.f32 %v400, %v409
      %v418 = vmul.f32 %v410, 0.044715
      %v419 = vmul.f32 %v411, 0.044715
      %v420 = vmul.f32 %v412, 0.044715
      %v421 = vmul.f32 %v413, 0.044715
      %v422 = vmul.f32 %v414, 0.044715
      %v423 = vmul.f32 %v415, 0.044715
      %v424 = vmul.f32 %v416, 0.044715
      %v425 = vmul.f32 %v417, 0.044715
      %v426 = vadd.f32 %v380, %v418
      %v427 = vadd.f32 %v382, %v419
      %v428 = vadd.f32 %v386, %v420
      %v429 = vadd.f32 %v388, %v421
      %v430 = vadd.f32 %v392, %v422
      %v431 = vadd.f32 %v394, %v423
      %v432 = vadd.f32 %v398, %v424
      %v433 = vadd.f32 %v400, %v425
      %v434 = vmul.f32 %v426, 0.7978846
      %v435 = vmul.f32 %v427, 0.7978846
      %v436 = vmul.f32 %v428, 0.7978846
      %v437 = vmul.f32 %v429, 0.7978846
      %v438 = vmul.f32 %v430, 0.7978846
      %v439 = vmul.f32 %v431, 0.7978846
      %v440 = vmul.f32 %v432, 0.7978846
      %v441 = vmul.f32 %v433, 0.7978846
      %v442 = vtanh.pop %v434
      %v443 = vtanh.pop %v435
      %v444 = vtanh.pop %v436
      %v445 = vtanh.pop %v437
      %v446 = vtanh.pop %v438
      %v447 = vtanh.pop %v439
      %v448 = vtanh.pop %v440
      %v449 = vtanh.pop %v441
      %v450 = vadd.f32 %v442, 1.0
      %v451 = vadd.f32 %v443, 1.0
      %v452 = vadd.f32 %v444, 1.0
      %v453 = vadd.f32 %v445, 1.0
      %v454 = vadd.f32 %v446, 1.0
      %v455 = vadd.f32 %v447, 1.0
      %v456 = vadd.f32 %v448, 1.0
      %v457 = vadd.f32 %v449, 1.0
      %v458 = vmul.f32 %v450, 0.5
      %v459 = vmul.f32 %v451, 0.5
      %v460 = vmul.f32 %v452, 0.5
      %v461 = vmul.f32 %v453, 0.5
      %v462 = vmul.f32 %v454, 0.5
      %v463 = vmul.f32 %v455, 0.5
      %v464 = vmul.f32 %v456, 0.5
      %v465 = vmul.f32 %v457, 0.5
      %v466 = vmul.f32 %v380, %v458
      %v467 = vmul.f32 %v382, %v459
      %v468 = vmul.f32 %v386, %v460
      %v469 = vmul.f32 %v388, %v461
      %v470 = vmul.f32 %v392, %v462
      %v471 = vmul.f32 %v394, %v463
      %v472 = vmul.f32 %v398, %v464
      %v473 = vmul.f32 %v400, %v465
      %v474 = vld [vmem:[%s3] sm:$0xf]
      %v475 = vld [vmem:[%s4] sm:$0xf]
      %477 = vset.pattern.permute.xlu0 0
      %478 = vperm.xlu0 %477, %v475
      %v479 = vpop.permute.xlu0 %478
      %vm481 = vcmask 261120
      %v483 = vsel %vm481, %v474, 0
      %485 = vmatprep.subr.mxu0 0.0
      %486 = vmatpush1.msra.mxu0 0.0
      %487 = vmatprep.subr.mxu0 0.0
      %488 = vmatpush1.msra.mxu0 0.0
      %489 = vmatprep.subr.mxu0 0.0
      %490 = vmatpush1.msra.mxu0 0.0
      %491 = vmatprep.subr.mxu0 0.0
      %492 = vmatpush1.msra.mxu0 0.0
      %493 = vmatprep.subr.mxu0 0.0
      %494 = vmatpush1.msra.mxu0 0.0
      %495 = vmatprep.subr.mxu0 0.0
      %496 = vmatpush1.msra.mxu0 0.0
      %497 = vmatprep.subr.mxu0 0.0
      %498 = vmatpush1.msra.mxu0 0.0
      %499 = vmatprep.subr.mxu0 0.0
      %500 = vmatpush1.msra.mxu0 0.0
      %501 = vmatprep.subr.mxu0 0.0
      %502 = vmatpush1.msra.mxu0 0.0
      %503 = vmatprep.subr.mxu0 0.0
      %504 = vmatpush1.msra.mxu0 0.0
      %505 = vmatprep.subr.mxu0 0.0
      %506 = vmatpush1.msra.mxu0 0.0
      %507 = vmatprep.subr.mxu0 0.0
      %508 = vmatpush1.msra.mxu0 0.0
      %509 = vmatprep.subr.mxu0 %v473
      %510 = vmatpush1.msra.mxu0 %v472
      %511 = vmatprep.subr.mxu0 %v471
      %512 = vmatpush1.msra.mxu0 %v470
      %513 = vmatprep.subr.mxu0 %v469
      %514 = vmatpush1.msra.mxu0 %v468
      %515 = vmatprep.subr.mxu0 %v467
      %516 = vmatpush1.msra.mxu0 %v466
      %517 = vmatprep.subr.mxu0 0.0
      %518 = vmatpush2.msra.mxu0 0.0
      %519 = vmatprep.subr.mxu0 0.0
      %520 = vmatpush2.msra.mxu0 0.0
      %521 = vmatprep.subr.mxu0 0.0
      %522 = vmatpush2.msra.mxu0 0.0
      %523 = vmatprep.subr.mxu0 0.0
      %524 = vmatpush2.msra.mxu0 0.0
      %525 = vmatprep.subr.mxu0 0.0
      %526 = vmatpush2.msra.mxu0 0.0
      %527 = vmatprep.subr.mxu0 0.0
      %528 = vmatpush2.msra.mxu0 0.0
      %529 = vmatprep.subr.mxu0 0.0
      %530 = vmatpush2.msra.mxu0 0.0
      %531 = vmatprep.subr.mxu0 0.0
      %532 = vmatpush2.msra.mxu0 0.0
      %533 = vmatprep.subr.mxu0 0.0
      %534 = vmatpush2.msra.mxu0 0.0
      %535 = vmatprep.subr.mxu0 0.0
      %536 = vmatpush2.msra.mxu0 0.0
      %537 = vmatprep.subr.mxu0 0.0
      %538 = vmatpush2.msra.mxu0 0.0
      %539 = vmatprep.subr.mxu0 0.0
      %540 = vmatpush2.msra.mxu0 0.0
      %541 = vmatprep.subr.mxu0 0.0
      %542 = vmatpush2.msra.mxu0 0.0
      %543 = vmatprep.subr.mxu0 0.0
      %544 = vmatpush2.msra.mxu0 0.0
      %545 = vmatprep.subr.mxu0 0.0
      %546 = vmatpush2.msra.mxu0 0.0
      %547 = vmatprep.subr.mxu0 0.0
      %548 = vmatpush2.msra.mxu0 0.0
      %549 = vmatprep.mubr.f32.mxu0 0.0
      %550 = vmatmul.mubr.f32.gmra.mxu0 %v483
      %v551 = vpop.f32.mrf.mxu0
      %v552 = vadd.f32 %v479, %v551
      %v553 = vpop.f32.mrf.mxu0
      %v554 = vadd.f32 %v479, %v553
      %555 = vdwg.mxu0
      %v558 = vcombine.low %v552, %v554
      %560 = vst [vmem:[%s262] sm:$0xff] %v558
      %s561 = smul.u32 2, %s21
      %p562 = scmp.lt.s32.totalorder %s20, 1
      %s563 = scalar_select %p562, %s20, 1
      %p564 = scmp.lt.s32.totalorder %s561, 1
      %s565 = scalar_select %p564, %s561, 1
      %s566 = smul.addr %s563, 2
      %s567 = sadd.s32 %s565, %s566
      %s568 = smul.addr %s567, 4
      %s569 = scalar_lea.vmem %s5, %s568
      // Predicated region
      $region41: #{conv_mlp_forward.1} parent=39 // pred_check
        %p570 = pneg %p160
      $region42: #{conv_mlp_forward.1} parent=39 // pred_check_branch
        %572 = sbr.rel (%p570) target = $region44
      $region43: #{conv_mlp_forward.1} parent=39 // pred_region
        %s573 = smul.u32 2, %s21
      $region44: #{conv_mlp_forward.1} parent=39 // pred_fallthru
        _
    $region40: #{conv_mlp_forward.1} parent=5 // pred_fallthru
      _
    %p574 = scmp.le.s32.totalorder 2, %s11
    // Predicated region
    $region45: #{conv_mlp_forward.1} parent=5 // pred_check
      %p575 = pneg %p574
    $region46: #{conv_mlp_forward.1} parent=5 // pred_check_branch
      %577 = sbr.rel (%p575) target = $region48
    $region47: #{conv_mlp_forward.1} parent=5 // pred_region
      %s578 = ssub.s32 %s11, 2
      // Predicated region
      $region49: #{conv_mlp_forward.1} parent=47 // pred_check
        %p579 = pneg %p166
      $region50: #{conv_mlp_forward.1} parent=47 // pred_check_branch
        %581 = sbr.rel (%p579) target = $region52
      $region51: #{conv_mlp_forward.1} parent=47 // pred_region
        %s582 = smul.u32 2, %s23
        %p583 = scmp.lt.s32.totalorder %s22, 1
        %s584 = scalar_select %p583, %s22, 1
        %p585 = scmp.lt.s32.totalorder %s582, 1
        %s586 = scalar_select %p585, %s582, 1
        %s587 = smul.addr %s584, 2
        %s588 = sadd.s32 %s586, %s587
        %s589 = smul.addr %s588, 4
        %s590 = scalar_lea.vmem %s5, %s589
      $region52: #{conv_mlp_forward.1} parent=47 // pred_fallthru
        _
    $region48: #{conv_mlp_forward.1} parent=5 // pred_fallthru
      _
  $region6: #{conv_mlp_forward.1} parent=0 // loop_footer
    %s15 = sadd.s32 1, %s11
  $region7: #{conv_mlp_forward.1} parent=0 // loop_footer_branch
    %10 = sbr.rel target = $region3
  $region8: #{conv_mlp_forward.1} parent=0 // loop_exit
    _

</llo_original>
